<compile_context>
chip_gen: v5e
topology: v5e:2x2
jax: 0.10.0
libtpu: 0.0.40
codegen_flags: <defaults>
</compile_context>

<pallas_src>
import functools

import jax
import jax.numpy as jnp
from jax.experimental import pallas as pl
from jax.experimental.pallas import tpu as pltpu

LSTM_ENCODING_LEN = 16
TIME_ENCODING_LEN = 8
IN_DIM = TIME_ENCODING_LEN + LSTM_ENCODING_LEN  # 24
POLICY_SIZE = 128
OUT_DIM = 5
OUT_PAD = 8       # small padding of the last layer; last dim == full array dim, so blocks are legal
SUBLANE = 8       # f32 sublane multiple for the batch tile
NEG_BIG = -1e30   # bias fill for the padded logit columns (exp underflows to 0 in f32)


def _round_up(n, m):
    return ((n + m - 1) // m) * m


def policy_kernel(x_ref, w1_ref, b1_ref, w2_ref, b2_ref, w3_ref, b3_ref, o_ref):
    """Whole forward pass (f32 matmuls, ReLUs, softmax) for one batch tile."""
    x = x_ref[...]  # f32 (bb, 24)

    # first: Linear(24 -> 128) + ReLU
    h = jnp.dot(x, w1_ref[...], preferred_element_type=jnp.float32) + b1_ref[...]
    h = jnp.maximum(h, 0.0)

    # middle (1 block): Linear(128 -> 128) + ReLU
    h = jnp.dot(h, w2_ref[...], preferred_element_type=jnp.float32) + b2_ref[...]
    h = jnp.maximum(h, 0.0)

    # last: Linear(128 -> 5), padded to 8 columns; padded columns have weight 0 and bias -1e30,
    # so after exp() they contribute exactly 0 to the softmax denominator.
    logits = jnp.dot(h, w3_ref[...], preferred_element_type=jnp.float32) + b3_ref[...]

    # numerically stable softmax over the feature axis (f32, exact divide)
    m = jnp.max(logits, axis=-1, keepdims=True)
    e = jnp.exp(logits - m)
    denom = jnp.sum(e, axis=-1, keepdims=True)
    o_ref[...] = (e / denom).astype(o_ref.dtype)


def prepare_params(w1, b1, w2, b2, w3, b3):
    """One-time weight prep (reshape biases, pad last layer 5 -> 8 columns). Tiny; hoisted
    out of the per-call path so the inference wrapper only pads the batch dimension."""
    w1_p = w1.astype(jnp.float32)                                   # (24, 128)
    w2_p = w2.astype(jnp.float32)                                   # (128, 128)
    w3_p = jnp.pad(w3.astype(jnp.float32),
                   ((0, 0), (0, OUT_PAD - OUT_DIM)))                # (128, 8), pad cols = 0
    b1_p = b1.reshape(1, POLICY_SIZE).astype(jnp.float32)
    b2_p = b2.reshape(1, POLICY_SIZE).astype(jnp.float32)
    b3_p = jnp.pad(b3.reshape(1, OUT_DIM).astype(jnp.float32),
                   ((0, 0), (0, OUT_PAD - OUT_DIM)),
                   constant_values=NEG_BIG)                         # (1, 8), pad cols = -1e30
    return (w1_p, b1_p, w2_p, b2_p, w3_p, b3_p)


@functools.partial(jax.jit, static_argnames=("block_b",))
def policy_forward(x, params, *, block_b=1024):
    w1_p, b1_p, w2_p, b2_p, w3_p, b3_p = params
    B = x.shape[0]

    # Batch tile: as large as possible up to block_b (multiple of 8). Small batches run in a
    # single grid step; large batches naturally produce many "parallel" steps (v7x megacore).
    bb = max(SUBLANE, min(_round_up(block_b, SUBLANE), _round_up(B, SUBLANE)))
    B_pad = _round_up(B, bb)
    grid = (B_pad // bb,)

    # Only the batch dim of x is padded; features stay at their true width (24 f32 = 96 B/row).
    x_p = jnp.pad(x.astype(jnp.float32), ((0, B_pad - B), (0, 0)))

    # Weights / biases are tiny (<100 KiB): VMEM-resident with a constant index_map.
    full = lambda shape: pl.BlockSpec(shape, lambda i: (0,) * len(shape))

    out = pl.pallas_call(
        policy_kernel,
        out_shape=jax.ShapeDtypeStruct((B_pad, OUT_PAD), jnp.float32),
        grid_spec=pltpu.PrefetchScalarGridSpec(
            num_scalar_prefetch=0,
            grid=grid,
            in_specs=[
                pl.BlockSpec((bb, IN_DIM), lambda i: (i, 0)),   # x tile (f32, true 24-wide)
                full((IN_DIM, POLICY_SIZE)),                    # W1
                full((1, POLICY_SIZE)),                         # b1
                full((POLICY_SIZE, POLICY_SIZE)),               # W2
                full((1, POLICY_SIZE)),                         # b2
                full((POLICY_SIZE, OUT_PAD)),                   # W3 (padded to 8 cols)
                full((1, OUT_PAD)),                             # b3 (padded, -1e30 fill)
            ],
            out_specs=pl.BlockSpec((bb, OUT_PAD), lambda i: (i, 0)),
        ),
        compiler_params=pltpu.CompilerParams(
            dimension_semantics=("parallel",),
        ),
    )(x_p, w1_p, b1_p, w2_p, b2_p, w3_p, b3_p)

    # Strip batch padding and the 3 padded output columns.
    return out[:B, :OUT_DIM]


def init_linear(key, fan_in, fan_out):
    """Deterministic init mimicking nn.Linear (uniform +/- 1/sqrt(fan_in))."""
    kw, kb = jax.random.split(key)
    bound = 1.0 / jnp.sqrt(float(fan_in))
    w = jax.random.uniform(kw, (fan_in, fan_out), jnp.float32, -bound, bound)
    b = jax.random.uniform(kb, (fan_out,), jnp.float32, -bound, bound)
    return w, b


def reference_forward(x, w1, b1, w2, b2, w3, b3):
    h = jnp.maximum(x @ w1 + b1, 0.0)
    h = jnp.maximum(h @ w2 + b2, 0.0)
    logits = h @ w3 + b3
    return jax.nn.softmax(logits, axis=1)


if __name__ == "__main__":
    key = jax.random.PRNGKey(0)
    k_x, k1, k2, k3 = jax.random.split(key, 4)

    batch = 50  # small, non-multiple of the tile -> also exercises batch padding
    x = jax.random.normal(k_x, (batch, IN_DIM), jnp.float32)

    w1, b1 = init_linear(k1, IN_DIM, POLICY_SIZE)
    w2, b2 = init_linear(k2, POLICY_SIZE, POLICY_SIZE)
    w3, b3 = init_linear(k3, POLICY_SIZE, OUT_DIM)

    params = prepare_params(w1, b1, w2, b2, w3, b3)  # one-time weight prep

    out = policy_forward(x, params)
    out = jax.block_until_ready(out)

    ref = reference_forward(x, w1, b1, w2, b2, w3, b3)
    assert out.shape == (batch, OUT_DIM)
    assert bool(jnp.all(jnp.isfinite(out))), "output contains non-finite values"
    # all-f32 matmuls + exact divide -> tight tolerance vs the f32 reference
    assert jnp.allclose(out, ref, atol=1e-5, rtol=1e-5), "mismatch vs reference"
    assert jnp.allclose(jnp.sum(out, axis=1), 1.0, atol=1e-5), "softmax rows must sum to 1"

    print("KERNEL_OK")
</pallas_src>

<mosaic_0001>
module attributes {stable_mosaic.version = 11 : i64} {
  func.func @policy_kernel(%arg0: i32, %arg1: memref<56x24xf32, #tpu.memory_space<vmem>>, %arg2: memref<24x128xf32, #tpu.memory_space<vmem>>, %arg3: memref<1x128xf32, #tpu.memory_space<vmem>>, %arg4: memref<128x128xf32, #tpu.memory_space<vmem>>, %arg5: memref<1x128xf32, #tpu.memory_space<vmem>>, %arg6: memref<128x8xf32, #tpu.memory_space<vmem>>, %arg7: memref<1x8xf32, #tpu.memory_space<vmem>>, %arg8: memref<56x8xf32, #tpu.memory_space<vmem>>) attributes {dimension_semantics = [#tpu.dimension_semantics<parallel>], iteration_bounds = array<i64: 1>, scalar_prefetch = 0 : i64, scratch_operands = 0 : i64, tpu.core_type = #tpu.core_type<tc>, window_params = [{transform_indices = @transform_0, window_bounds = array<i64: 56, 24>}, {pipeline_mode = #tpu.pipeline_mode<synchronous>, transform_indices = @transform_1, window_bounds = array<i64: 24, 128>}, {pipeline_mode = #tpu.pipeline_mode<synchronous>, transform_indices = @transform_2, window_bounds = array<i64: 1, 128>}, {pipeline_mode = #tpu.pipeline_mode<synchronous>, transform_indices = @transform_3, window_bounds = array<i64: 128, 128>}, {pipeline_mode = #tpu.pipeline_mode<synchronous>, transform_indices = @transform_4, window_bounds = array<i64: 1, 128>}, {pipeline_mode = #tpu.pipeline_mode<synchronous>, transform_indices = @transform_5, window_bounds = array<i64: 128, 8>}, {pipeline_mode = #tpu.pipeline_mode<synchronous>, transform_indices = @transform_6, window_bounds = array<i64: 1, 8>}, {transform_indices = @transform_7, window_bounds = array<i64: 56, 8>}]} {
    %c0 = arith.constant 0 : index
    %c0_0 = arith.constant 0 : index
    %0 = vector.load %arg1[%c0, %c0_0] : memref<56x24xf32, #tpu.memory_space<vmem>>, vector<56x24xf32>
    %c0_1 = arith.constant 0 : index
    %c0_2 = arith.constant 0 : index
    %1 = vector.load %arg2[%c0_1, %c0_2] : memref<24x128xf32, #tpu.memory_space<vmem>>, vector<24x128xf32>
    %cst = arith.constant dense<0.000000e+00> : vector<56x128xf32>
    %2 = tpu.matmul %0, %1, %cst {dimension_numbers = #tpu.dot_dimension_numbers<[1], [0], [0], [1], [0, 0, 1, 1], [], []>} : vector<56x24xf32>, vector<24x128xf32>, vector<56x128xf32> -> vector<56x128xf32>
    %c0_3 = arith.constant 0 : index
    %c0_4 = arith.constant 0 : index
    %3 = vector.load %arg3[%c0_3, %c0_4] : memref<1x128xf32, #tpu.memory_space<vmem>>, vector<1x128xf32>
    %4 = vector.broadcast %3 : vector<1x128xf32> to vector<56x128xf32>
    %5 = arith.addf %2, %4 : vector<56x128xf32>
    %cst_5 = arith.constant 0.000000e+00 : f32
    %6 = vector.broadcast %cst_5 : f32 to vector<56x128xf32>
    %7 = arith.maximumf %5, %6 : vector<56x128xf32>
    %c0_6 = arith.constant 0 : index
    %c0_7 = arith.constant 0 : index
    %8 = vector.load %arg4[%c0_6, %c0_7] : memref<128x128xf32, #tpu.memory_space<vmem>>, vector<128x128xf32>
    %cst_8 = arith.constant dense<0.000000e+00> : vector<56x128xf32>
    %9 = tpu.matmul %7, %8, %cst_8 {dimension_numbers = #tpu.dot_dimension_numbers<[1], [0], [0], [1], [0, 0, 1, 1], [], []>} : vector<56x128xf32>, vector<128x128xf32>, vector<56x128xf32> -> vector<56x128xf32>
    %c0_9 = arith.constant 0 : index
    %c0_10 = arith.constant 0 : index
    %10 = vector.load %arg5[%c0_9, %c0_10] : memref<1x128xf32, #tpu.memory_space<vmem>>, vector<1x128xf32>
    %11 = vector.broadcast %10 : vector<1x128xf32> to vector<56x128xf32>
    %12 = arith.addf %9, %11 : vector<56x128xf32>
    %cst_11 = arith.constant 0.000000e+00 : f32
    %13 = vector.broadcast %cst_11 : f32 to vector<56x128xf32>
    %14 = arith.maximumf %12, %13 : vector<56x128xf32>
    %c0_12 = arith.constant 0 : index
    %c0_13 = arith.constant 0 : index
    %15 = vector.load %arg6[%c0_12, %c0_13] : memref<128x8xf32, #tpu.memory_space<vmem>>, vector<128x8xf32>
    %cst_14 = arith.constant dense<0.000000e+00> : vector<56x8xf32>
    %16 = tpu.matmul %14, %15, %cst_14 {dimension_numbers = #tpu.dot_dimension_numbers<[1], [0], [0], [1], [0, 0, 1, 1], [], []>} : vector<56x128xf32>, vector<128x8xf32>, vector<56x8xf32> -> vector<56x8xf32>
    %c0_15 = arith.constant 0 : index
    %c0_16 = arith.constant 0 : index
    %17 = vector.load %arg7[%c0_15, %c0_16] : memref<1x8xf32, #tpu.memory_space<vmem>>, vector<1x8xf32>
    %18 = vector.broadcast %17 : vector<1x8xf32> to vector<56x8xf32>
    %19 = arith.addf %16, %18 : vector<56x8xf32>
    %cst_17 = arith.constant dense<0xFF800000> : vector<56xf32>
    %20 = vector.multi_reduction <maximumf>, %19, %cst_17 [1] : vector<56x8xf32> to vector<56xf32>
    %21 = vector.shape_cast %20 : vector<56xf32> to vector<56x1xf32>
    %22 = vector.broadcast %21 : vector<56x1xf32> to vector<56x8xf32>
    %23 = arith.subf %19, %22 : vector<56x8xf32>
    %24 = math.exp %23 : vector<56x8xf32>
    %cst_18 = arith.constant dense<0.000000e+00> : vector<56xf32>
    %25 = vector.multi_reduction <add>, %24, %cst_18 [1] : vector<56x8xf32> to vector<56xf32>
    %26 = vector.shape_cast %25 : vector<56xf32> to vector<56x1xf32>
    %27 = vector.broadcast %26 : vector<56x1xf32> to vector<56x8xf32>
    %28 = arith.divf %24, %27 : vector<56x8xf32>
    %c0_19 = arith.constant 0 : index
    %c0_20 = arith.constant 0 : index
    %29 = vector.load %arg8[%c0_19, %c0_20] : memref<56x8xf32, #tpu.memory_space<vmem>>, vector<56x8xf32>
    tpu.vector_store %arg8[%c0_19, %c0_20], %28 {strides = array<i32>} : memref<56x8xf32, #tpu.memory_space<vmem>>, vector<56x8xf32>,
    return
  }
  func.func @transform_0(%arg0: i32) -> (i32, i32) {
    %c0_i32 = arith.constant 0 : i32
    %c0_i32_0 = arith.constant 0 : i32
    return %arg0, %c0_i32 : i32, i32
  }
  func.func @transform_1(%arg0: i32) -> (i32, i32) {
    %c0_i32 = arith.constant 0 : i32
    %c0_i32_0 = arith.constant 0 : i32
    %c0_i32_1 = arith.constant 0 : i32
    return %c0_i32, %c0_i32_0 : i32, i32
  }
  func.func @transform_2(%arg0: i32) -> (i32, i32) {
    %c0_i32 = arith.constant 0 : i32
    %c0_i32_0 = arith.constant 0 : i32
    %c0_i32_1 = arith.constant 0 : i32
    return %c0_i32, %c0_i32_0 : i32, i32
  }
  func.func @transform_3(%arg0: i32) -> (i32, i32) {
    %c0_i32 = arith.constant 0 : i32
    %c0_i32_0 = arith.constant 0 : i32
    %c0_i32_1 = arith.constant 0 : i32
    return %c0_i32, %c0_i32_0 : i32, i32
  }
  func.func @transform_4(%arg0: i32) -> (i32, i32) {
    %c0_i32 = arith.constant 0 : i32
    %c0_i32_0 = arith.constant 0 : i32
    %c0_i32_1 = arith.constant 0 : i32
    return %c0_i32, %c0_i32_0 : i32, i32
  }
  func.func @transform_5(%arg0: i32) -> (i32, i32) {
    %c0_i32 = arith.constant 0 : i32
    %c0_i32_0 = arith.constant 0 : i32
    %c0_i32_1 = arith.constant 0 : i32
    return %c0_i32, %c0_i32_0 : i32, i32
  }
  func.func @transform_6(%arg0: i32) -> (i32, i32) {
    %c0_i32 = arith.constant 0 : i32
    %c0_i32_0 = arith.constant 0 : i32
    %c0_i32_1 = arith.constant 0 : i32
    return %c0_i32, %c0_i32_0 : i32, i32
  }
  func.func @transform_7(%arg0: i32) -> (i32, i32) {
    %c0_i32 = arith.constant 0 : i32
    %c0_i32_0 = arith.constant 0 : i32
    return %arg0, %c0_i32 : i32, i32
  }
}

</mosaic_0001>

<llo_original>
// kernel: policy_forward.1
$region0: #{policy_forward.1}
  #allocation0 [shape = 'u32[]', space=smem, size = 0x4, offset = 0x4, fixed_abs, tag = 'smem constant byte address 0x4 - core index']
  #allocation1 [shape = 'u32[72,128]{1,0:T(1,128)}', space=vmem, size = 0x9000, scoped, tag = 'internal scratch']
  %s0 = inlined_call_operand.vmem [shape: f32[56,24], index: 0, kind: input, shape index: {}]
  %s1 = inlined_call_operand.vmem [shape: f32[24,128], index: 1, kind: input, shape index: {}]
  %s2 = inlined_call_operand.vmem [shape: f32[1,128], index: 2, kind: input, shape index: {}]
  %s3 = inlined_call_operand.vmem [shape: f32[128,128], index: 3, kind: input, shape index: {}]
  %s4 = inlined_call_operand.vmem [shape: f32[1,128], index: 4, kind: input, shape index: {}]
  %s5 = inlined_call_operand.vmem [shape: f32[128,8], index: 5, kind: input, shape index: {}]
  %s6 = inlined_call_operand.vmem [shape: f32[1,8], index: 6, kind: input, shape index: {}]
  %s7 = inlined_call_operand.vmem [shape: f32[56,8], index: 7, kind: output, shape index: {}]
  %s8 = sld [smem:[#allocation0]]
  $region38: #{policy_forward.1} parent=0
    _
  %s10 = ssub.s32 1, %s8
  %s11 = scalar_select 0, %s10, %s8
  // Predicated region
  $region2: #{policy_forward.1} parent=0 // pred_check
    _
  $region3: #{policy_forward.1} parent=0 // pred_check_branch
    %13 = sbr.rel (0) target = $region5
  $region4: #{policy_forward.1} parent=0 // pred_region
    _
  $region5: #{policy_forward.1} parent=0 // pred_fallthru
    _
  // Predicated region
  $region6: #{policy_forward.1} parent=0 // pred_check
    _
  $region7: #{policy_forward.1} parent=0 // pred_check_branch
    %15 = sbr.rel (0) target = $region9
  $region8: #{policy_forward.1} parent=0 // pred_region
    _
  $region9: #{policy_forward.1} parent=0 // pred_fallthru
    _
  // Predicated region
  $region10: #{policy_forward.1} parent=0 // pred_check
    _
  $region11: #{policy_forward.1} parent=0 // pred_check_branch
    %17 = sbr.rel (0) target = $region13
  $region12: #{policy_forward.1} parent=0 // pred_region
    _
  $region13: #{policy_forward.1} parent=0 // pred_fallthru
    _
  // Predicated region
  $region14: #{policy_forward.1} parent=0 // pred_check
    _
  $region15: #{policy_forward.1} parent=0 // pred_check_branch
    %19 = sbr.rel (0) target = $region17
  $region16: #{policy_forward.1} parent=0 // pred_region
    _
  $region17: #{policy_forward.1} parent=0 // pred_fallthru
    _
  // Predicated region
  $region18: #{policy_forward.1} parent=0 // pred_check
    _
  $region19: #{policy_forward.1} parent=0 // pred_check_branch
    %21 = sbr.rel (0) target = $region21
  $region20: #{policy_forward.1} parent=0 // pred_region
    _
  $region21: #{policy_forward.1} parent=0 // pred_fallthru
    _
  // Predicated region
  $region22: #{policy_forward.1} parent=0 // pred_check
    _
  $region23: #{policy_forward.1} parent=0 // pred_check_branch
    %23 = sbr.rel (0) target = $region25
  $region24: #{policy_forward.1} parent=0 // pred_region
    _
  $region25: #{policy_forward.1} parent=0 // pred_fallthru
    _
  // Predicated region
  $region26: #{policy_forward.1} parent=0 // pred_check
    _
  $region27: #{policy_forward.1} parent=0 // pred_check_branch
    %25 = sbr.rel (0) target = $region29
  $region28: #{policy_forward.1} parent=0 // pred_region
    _
  $region29: #{policy_forward.1} parent=0 // pred_fallthru
    _
  %v26 = vld [vmem:[%s0] sm:$0xff]
  %v27 = vld [vmem:[%s0 + $0x8] sm:$0xff]
  %v28 = vld [vmem:[%s0 + $0x10] sm:$0xff]
  %v29 = vld [vmem:[%s0 + $0x18] sm:$0xff]
  %v30 = vld [vmem:[%s0 + $0x20] sm:$0xff]
  %v31 = vld [vmem:[%s0 + $0x28] sm:$0xff]
  %v32 = vld [vmem:[%s0 + $0x30] sm:$0xff]
  %v33 = vld [vmem:[%s1] sm:$0xff]
  %v34 = vld [vmem:[%s1 + $0x8] sm:$0xff]
  %v35 = vld [vmem:[%s1 + $0x10] sm:$0xff]
  %v36 = vld [vmem:[%s2] sm:$0x1]
  %v38 = vperm.slane %v36, 0
  %vm40 = vcmask 195584
  %v42 = vsel %vm40, %v26, 0
  %v45 = vsel %vm40, %v27, 0
  %v48 = vsel %vm40, %v28, 0
  %v51 = vsel %vm40, %v29, 0
  %v54 = vsel %vm40, %v30, 0
  %v57 = vsel %vm40, %v31, 0
  %v60 = vsel %vm40, %v32, 0
  %62 = vmatpush.msra.mxu0 0.0
  %63 = vmatpush.msra.mxu0 0.0
  %64 = vmatpush.msra.mxu0 0.0
  %65 = vmatpush.msra.mxu0 0.0
  %66 = vmatpush.msra.mxu0 0.0
  %67 = vmatpush.msra.mxu0 0.0
  %68 = vmatpush.msra.mxu0 0.0
  %69 = vmatpush.msra.mxu0 0.0
  %70 = vmatpush.msra.mxu0 0.0
  %71 = vmatpush.msra.mxu0 0.0
  %72 = vmatpush.msra.mxu0 0.0
  %73 = vmatpush.msra.mxu0 0.0
  %74 = vmatpush.msra.mxu0 0.0
  %75 = vmatpush.msra.mxu0 %v35
  %76 = vmatpush.msra.mxu0 %v34
  %77 = vmatpush.msra.mxu0 %v33
  %78 = vmatmul.f32.gmra.mxu0 %v42
  %v79 = vpop.f32.mrf.mxu0
  %v80 = vadd.f32 %v38, %v79
  %81 = vmatmul.f32.gmra.mxu0 %v45
  %v82 = vpop.f32.mrf.mxu0
  %v83 = vadd.f32 %v38, %v82
  %84 = vmatmul.f32.gmra.mxu0 %v48
  %v85 = vpop.f32.mrf.mxu0
  %v86 = vadd.f32 %v38, %v85
  %87 = vmatmul.f32.gmra.mxu0 %v51
  %v88 = vpop.f32.mrf.mxu0
  %v89 = vadd.f32 %v38, %v88
  %90 = vmatmul.f32.gmra.mxu0 %v54
  %v91 = vpop.f32.mrf.mxu0
  %v92 = vadd.f32 %v38, %v91
  %93 = vmatmul.f32.gmra.mxu0 %v57
  %v94 = vpop.f32.mrf.mxu0
  %v95 = vadd.f32 %v38, %v94
  %96 = vmatmul.f32.gmra.mxu0 %v60
  %v97 = vpop.f32.mrf.mxu0
  %v98 = vadd.f32 %v38, %v97
  %99 = vdwg.mxu0
  %v100 = vmax.f32 %v80, 0.0
  %v101 = vmax.f32 %v83, 0.0
  %v102 = vmax.f32 %v86, 0.0
  %v103 = vmax.f32 %v89, 0.0
  %v104 = vmax.f32 %v92, 0.0
  %v105 = vmax.f32 %v95, 0.0
  %v106 = vmax.f32 %v98, 0.0
  %v107 = vld [vmem:[%s3] sm:$0xff]
  %v108 = vld [vmem:[%s3 + $0x8] sm:$0xff]
  %v109 = vld [vmem:[%s3 + $0x10] sm:$0xff]
  %v110 = vld [vmem:[%s3 + $0x18] sm:$0xff]
  %v111 = vld [vmem:[%s3 + $0x20] sm:$0xff]
  %v112 = vld [vmem:[%s3 + $0x28] sm:$0xff]
  %v113 = vld [vmem:[%s3 + $0x30] sm:$0xff]
  %v114 = vld [vmem:[%s3 + $0x38] sm:$0xff]
  %v115 = vld [vmem:[%s3 + $0x40] sm:$0xff]
  %v116 = vld [vmem:[%s3 + $0x48] sm:$0xff]
  %v117 = vld [vmem:[%s3 + $0x50] sm:$0xff]
  %v118 = vld [vmem:[%s3 + $0x58] sm:$0xff]
  %v119 = vld [vmem:[%s3 + $0x60] sm:$0xff]
  %v120 = vld [vmem:[%s3 + $0x68] sm:$0xff]
  %v121 = vld [vmem:[%s3 + $0x70] sm:$0xff]
  %v122 = vld [vmem:[%s3 + $0x78] sm:$0xff]
  %v123 = vld [vmem:[%s4] sm:$0x1]
  %v125 = vperm.slane %v123, 0
  %127 = vmatpush.msra.mxu0 %v122
  %128 = vmatpush.msra.mxu0 %v121
  %129 = vmatpush.msra.mxu0 %v120
  %130 = vmatpush.msra.mxu0 %v119
  %131 = vmatpush.msra.mxu0 %v118
  %132 = vmatpush.msra.mxu0 %v117
  %133 = vmatpush.msra.mxu0 %v116
  %134 = vmatpush.msra.mxu0 %v115
  %135 = vmatpush.msra.mxu0 %v114
  %136 = vmatpush.msra.mxu0 %v113
  %137 = vmatpush.msra.mxu0 %v112
  %138 = vmatpush.msra.mxu0 %v111
  %139 = vmatpush.msra.mxu0 %v110
  %140 = vmatpush.msra.mxu0 %v109
  %141 = vmatpush.msra.mxu0 %v108
  %142 = vmatpush.msra.mxu0 %v107
  %143 = vmatmul.f32.gmra.mxu0 %v100
  %v144 = vpop.f32.mrf.mxu0
  %v145 = vadd.f32 %v125, %v144
  %146 = vmatmul.f32.gmra.mxu0 %v101
  %v147 = vpop.f32.mrf.mxu0
  %v148 = vadd.f32 %v125, %v147
  %149 = vmatmul.f32.gmra.mxu0 %v102
  %v150 = vpop.f32.mrf.mxu0
  %v151 = vadd.f32 %v125, %v150
  %152 = vmatmul.f32.gmra.mxu0 %v103
  %v153 = vpop.f32.mrf.mxu0
  %v154 = vadd.f32 %v125, %v153
  %155 = vmatmul.f32.gmra.mxu0 %v104
  %v156 = vpop.f32.mrf.mxu0
  %v157 = vadd.f32 %v125, %v156
  %158 = vmatmul.f32.gmra.mxu0 %v105
  %v159 = vpop.f32.mrf.mxu0
  %v160 = vadd.f32 %v125, %v159
  %161 = vmatmul.f32.gmra.mxu0 %v106
  %v162 = vpop.f32.mrf.mxu0
  %v163 = vadd.f32 %v125, %v162
  %164 = vdwg.mxu0
  %v165 = vmax.f32 %v145, 0.0
  %v166 = vmax.f32 %v148, 0.0
  %v167 = vmax.f32 %v151, 0.0
  %v168 = vmax.f32 %v154, 0.0
  %v169 = vmax.f32 %v157, 0.0
  %v170 = vmax.f32 %v160, 0.0
  %v171 = vmax.f32 %v163, 0.0
  %v172 = vld [vmem:[%s5] sm:$0xff]
  %v173 = vld [vmem:[%s5 + $0x8] sm:$0xff]
  %v174 = vld [vmem:[%s5 + $0x10] sm:$0xff]
  %v175 = vld [vmem:[%s5 + $0x18] sm:$0xff]
  %v176 = vld [vmem:[%s5 + $0x20] sm:$0xff]
  %v177 = vld [vmem:[%s5 + $0x28] sm:$0xff]
  %v178 = vld [vmem:[%s5 + $0x30] sm:$0xff]
  %v179 = vld [vmem:[%s5 + $0x38] sm:$0xff]
  %v180 = vld [vmem:[%s5 + $0x40] sm:$0xff]
  %v181 = vld [vmem:[%s5 + $0x48] sm:$0xff]
  %v182 = vld [vmem:[%s5 + $0x50] sm:$0xff]
  %v183 = vld [vmem:[%s5 + $0x58] sm:$0xff]
  %v184 = vld [vmem:[%s5 + $0x60] sm:$0xff]
  %v185 = vld [vmem:[%s5 + $0x68] sm:$0xff]
  %v186 = vld [vmem:[%s5 + $0x70] sm:$0xff]
  %v187 = vld [vmem:[%s5 + $0x78] sm:$0xff]
  %v188 = vld [vmem:[%s6] sm:$0x1]
  %v190 = vperm.slane %v188, 0
  %192 = vmatpush.msra.mxu0 %v187
  %193 = vmatpush.msra.mxu0 %v186
  %194 = vmatpush.msra.mxu0 %v185
  %195 = vmatpush.msra.mxu0 %v184
  %196 = vmatpush.msra.mxu0 %v183
  %197 = vmatpush.msra.mxu0 %v182
  %198 = vmatpush.msra.mxu0 %v181
  %199 = vmatpush.msra.mxu0 %v180
  %200 = vmatpush.msra.mxu0 %v179
  %201 = vmatpush.msra.mxu0 %v178
  %202 = vmatpush.msra.mxu0 %v177
  %203 = vmatpush.msra.mxu0 %v176
  %204 = vmatpush.msra.mxu0 %v175
  %205 = vmatpush.msra.mxu0 %v174
  %206 = vmatpush.msra.mxu0 %v173
  %207 = vmatpush.msra.mxu0 %v172
  %208 = vmatmul.f32.gmra.mxu0 %v165
  %v209 = vpop.f32.mrf.mxu0
  %v210 = vadd.f32 %v190, %v209
  %211 = vmatmul.f32.gmra.mxu0 %v166
  %v212 = vpop.f32.mrf.mxu0
  %v213 = vadd.f32 %v190, %v212
  %214 = vmatmul.f32.gmra.mxu0 %v167
  %v215 = vpop.f32.mrf.mxu0
  %v216 = vadd.f32 %v190, %v215
  %217 = vmatmul.f32.gmra.mxu0 %v168
  %v218 = vpop.f32.mrf.mxu0
  %v219 = vadd.f32 %v190, %v218
  %220 = vmatmul.f32.gmra.mxu0 %v169
  %v221 = vpop.f32.mrf.mxu0
  %v222 = vadd.f32 %v190, %v221
  %223 = vmatmul.f32.gmra.mxu0 %v170
  %v224 = vpop.f32.mrf.mxu0
  %v225 = vadd.f32 %v190, %v224
  %226 = vmatmul.f32.gmra.mxu0 %v171
  %v227 = vpop.f32.mrf.mxu0
  %v228 = vadd.f32 %v190, %v227
  %229 = vdwg.mxu0
  %vm230 = vcmask 64512
  %v231 = vsel %vm230, %v210, -inf
  %232 = vmax.xlane.f32.xlu0 %v231
  %v233 = vpop.xlane.xlu0 %232
  %v234 = vsel %vm230, %v213, -inf
  %235 = vmax.xlane.f32.xlu0 %v234
  %v236 = vpop.xlane.xlu0 %235
  %v237 = vsel %vm230, %v216, -inf
  %238 = vmax.xlane.f32.xlu0 %v237
  %v239 = vpop.xlane.xlu0 %238
  %v240 = vsel %vm230, %v219, -inf
  %241 = vmax.xlane.f32.xlu0 %v240
  %v242 = vpop.xlane.xlu0 %241
  %v243 = vsel %vm230, %v222, -inf
  %244 = vmax.xlane.f32.xlu0 %v243
  %v245 = vpop.xlane.xlu0 %244
  %v246 = vsel %vm230, %v225, -inf
  %247 = vmax.xlane.f32.xlu0 %v246
  %v248 = vpop.xlane.xlu0 %247
  %v249 = vsel %vm230, %v228, -inf
  %250 = vmax.xlane.f32.xlu0 %v249
  %v251 = vpop.xlane.xlu0 %250
  %v252 = vsub.f32 %v210, %v233
  %v253 = vsub.f32 %v213, %v236
  %v254 = vsub.f32 %v216, %v239
  %v255 = vsub.f32 %v219, %v242
  %v256 = vsub.f32 %v222, %v245
  %v257 = vsub.f32 %v225, %v248
  %v258 = vsub.f32 %v228, %v251
  %v259 = vmul.f32 %v252, 1.442695
  %v260 = vpow.pop %v259
  %v261 = vmul.f32 %v253, 1.442695
  %v262 = vpow.pop %v261
  %v263 = vmul.f32 %v254, 1.442695
  %v264 = vpow.pop %v263
  %v265 = vmul.f32 %v255, 1.442695
  %v266 = vpow.pop %v265
  %v267 = vmul.f32 %v256, 1.442695
  %v268 = vpow.pop %v267
  %v269 = vmul.f32 %v257, 1.442695
  %v270 = vpow.pop %v269
  %v271 = vmul.f32 %v258, 1.442695
  %v272 = vpow.pop %v271
  %v273 = vsel %vm230, %v260, 0.0
  %274 = vadd.xlane.f32.xlu0 %v273
  %v275 = vpop.xlane.xlu0 %274
  %v276 = vsel %vm230, %v262, 0.0
  %277 = vadd.xlane.f32.xlu0 %v276
  %v278 = vpop.xlane.xlu0 %277
  %v279 = vsel %vm230, %v264, 0.0
  %280 = vadd.xlane.f32.xlu0 %v279
  %v281 = vpop.xlane.xlu0 %280
  %v282 = vsel %vm230, %v266, 0.0
  %283 = vadd.xlane.f32.xlu0 %v282
  %v284 = vpop.xlane.xlu0 %283
  %v285 = vsel %vm230, %v268, 0.0
  %286 = vadd.xlane.f32.xlu0 %v285
  %v287 = vpop.xlane.xlu0 %286
  %v288 = vsel %vm230, %v270, 0.0
  %289 = vadd.xlane.f32.xlu0 %v288
  %v290 = vpop.xlane.xlu0 %289
  %v291 = vsel %vm230, %v272, 0.0
  %292 = vadd.xlane.f32.xlu0 %v291
  %v293 = vpop.xlane.xlu0 %292
  %v294 = vrcp.pop %v275
  %v295 = vmul.f32 %v275, %v294
  %v296 = vsub.f32 1.0, %v295
  %v297 = vmul.f32 %v294, %v296
  %v298 = vadd.f32 %v294, %v297
  %vm299 = vweird.f32 %v275
  %vm300 = vweird.f32 %v294
  %vm301 = vmor %vm299, %vm300
  %v302 = vsel %vm301, %v294, %v298
  %v303 = vand.u32 2147483647, %v275
  %vm304 = vcmp.eq.f32.partialorder %v303, 8.507059e+37
  %v305 = vand.u32 %v275, 2147483648
  %v306 = vor.u32 1.1754944e-38, %v305
  %v307 = vsel %vm304, %v306, %v302
  %v308 = vmul.f32 %v260, %v307
  %v309 = vrcp.pop %v278
  %v310 = vmul.f32 %v278, %v309
  %v311 = vsub.f32 1.0, %v310
  %v312 = vmul.f32 %v309, %v311
  %v313 = vadd.f32 %v309, %v312
  %vm314 = vweird.f32 %v278
  %vm315 = vweird.f32 %v309
  %vm316 = vmor %vm314, %vm315
  %v317 = vsel %vm316, %v309, %v313
  %v318 = vand.u32 2147483647, %v278
  %vm319 = vcmp.eq.f32.partialorder %v318, 8.507059e+37
  %v320 = vand.u32 %v278, 2147483648
  %v321 = vor.u32 1.1754944e-38, %v320
  %v322 = vsel %vm319, %v321, %v317
  %v323 = vmul.f32 %v262, %v322
  %v324 = vrcp.pop %v281
  %v325 = vmul.f32 %v281, %v324
  %v326 = vsub.f32 1.0, %v325
  %v327 = vmul.f32 %v324, %v326
  %v328 = vadd.f32 %v324, %v327
  %vm329 = vweird.f32 %v281
  %vm330 = vweird.f32 %v324
  %vm331 = vmor %vm329, %vm330
  %v332 = vsel %vm331, %v324, %v328
  %v333 = vand.u32 2147483647, %v281
  %vm334 = vcmp.eq.f32.partialorder %v333, 8.507059e+37
  %v335 = vand.u32 %v281, 2147483648
  %v336 = vor.u32 1.1754944e-38, %v335
  %v337 = vsel %vm334, %v336, %v332
  %v338 = vmul.f32 %v264, %v337
  %v339 = vrcp.pop %v284
  %v340 = vmul.f32 %v284, %v339
  %v341 = vsub.f32 1.0, %v340
  %v342 = vmul.f32 %v339, %v341
  %v343 = vadd.f32 %v339, %v342
  %vm344 = vweird.f32 %v284
  %vm345 = vweird.f32 %v339
  %vm346 = vmor %vm344, %vm345
  %v347 = vsel %vm346, %v339, %v343
  %v348 = vand.u32 2147483647, %v284
  %vm349 = vcmp.eq.f32.partialorder %v348, 8.507059e+37
  %v350 = vand.u32 %v284, 2147483648
  %v351 = vor.u32 1.1754944e-38, %v350
  %v352 = vsel %vm349, %v351, %v347
  %v353 = vmul.f32 %v266, %v352
  %v354 = vrcp.pop %v287
  %v355 = vmul.f32 %v287, %v354
  %v356 = vsub.f32 1.0, %v355
  %v357 = vmul.f32 %v354, %v356
  %v358 = vadd.f32 %v354, %v357
  %vm359 = vweird.f32 %v287
  %vm360 = vweird.f32 %v354
  %vm361 = vmor %vm359, %vm360
  %v362 = vsel %vm361, %v354, %v358
  %v363 = vand.u32 2147483647, %v287
  %vm364 = vcmp.eq.f32.partialorder %v363, 8.507059e+37
  %v365 = vand.u32 %v287, 2147483648
  %v366 = vor.u32 1.1754944e-38, %v365
  %v367 = vsel %vm364, %v366, %v362
  %v368 = vmul.f32 %v268, %v367
  %v369 = vrcp.pop %v290
  %v370 = vmul.f32 %v290, %v369
  %v371 = vsub.f32 1.0, %v370
  %v372 = vmul.f32 %v369, %v371
  %v373 = vadd.f32 %v369, %v372
  %vm374 = vweird.f32 %v290
  %vm375 = vweird.f32 %v369
  %vm376 = vmor %vm374, %vm375
  %v377 = vsel %vm376, %v369, %v373
  %v378 = vand.u32 2147483647, %v290
  %vm379 = vcmp.eq.f32.partialorder %v378, 8.507059e+37
  %v380 = vand.u32 %v290, 2147483648
  %v381 = vor.u32 1.1754944e-38, %v380
  %v382 = vsel %vm379, %v381, %v377
  %v383 = vmul.f32 %v270, %v382
  %v384 = vrcp.pop %v293
  %v385 = vmul.f32 %v293, %v384
  %v386 = vsub.f32 1.0, %v385
  %v387 = vmul.f32 %v384, %v386
  %v388 = vadd.f32 %v384, %v387
  %vm389 = vweird.f32 %v293
  %vm390 = vweird.f32 %v384
  %vm391 = vmor %vm389, %vm390
  %v392 = vsel %vm391, %v384, %v388
  %v393 = vand.u32 2147483647, %v293
  %vm394 = vcmp.eq.f32.partialorder %v393, 8.507059e+37
  %v395 = vand.u32 %v293, 2147483648
  %v396 = vor.u32 1.1754944e-38, %v395
  %v397 = vsel %vm394, %v396, %v392
  %v398 = vmul.f32 %v272, %v397
  %399 = vst.msk [vmem:[%s7] sm:$0xff] %vm230, %v308
  %400 = vst.msk [vmem:[%s7 + $0x8] sm:$0xff] %vm230, %v323
  %401 = vst.msk [vmem:[%s7 + $0x10] sm:$0xff] %vm230, %v338
  %402 = vst.msk [vmem:[%s7 + $0x18] sm:$0xff] %vm230, %v353
  %403 = vst.msk [vmem:[%s7 + $0x20] sm:$0xff] %vm230, %v368
  %404 = vst.msk [vmem:[%s7 + $0x28] sm:$0xff] %vm230, %v383
  %405 = vst.msk [vmem:[%s7 + $0x30] sm:$0xff] %vm230, %v398
  // Predicated region
  $region30: #{policy_forward.1} parent=0 // pred_check
    _
  $region31: #{policy_forward.1} parent=0 // pred_check_branch
    %407 = sbr.rel (0) target = $region33
  $region32: #{policy_forward.1} parent=0 // pred_region
    _
  $region33: #{policy_forward.1} parent=0 // pred_fallthru
    _
  // Predicated region
  $region34: #{policy_forward.1} parent=0 // pred_check
    _
  $region35: #{policy_forward.1} parent=0 // pred_check_branch
    %409 = sbr.rel (0) target = $region37
  $region36: #{policy_forward.1} parent=0 // pred_region
    _
  $region37: #{policy_forward.1} parent=0 // pred_fallthru
    _

</llo_original>
